<compile_context>
chip_gen: v6e
topology: v6e:2x2x1
jax: 0.10.0
libtpu: 0.0.40
codegen_flags: <defaults>
</compile_context>

<pallas_src>
import functools

import jax
import jax.numpy as jnp
from jax.experimental import pallas as pl

_NEG_BIG = -1e30                       # logit filler for padded action columns
_I32_MAX = jnp.iinfo(jnp.int32).max


def _round8(n):
    return ((n + 7) // 8) * 8


def _param_layout(S, H1, H2, A):
    """Row offsets of each parameter inside the packed (rows, H) buffer."""
    assert H1 == H2, "packing assumes equal hidden widths"
    off_w1 = 0
    off_w2 = off_w1 + _round8(S)
    off_w3 = off_w2 + _round8(H1)
    off_b1 = off_w3 + _round8(H2)
    off_b2 = off_b1 + 8
    off_b3 = off_b2 + 8
    rows = off_b3 + 8
    return dict(W=H1, off_w1=off_w1, off_w2=off_w2, off_w3=off_w3,
                off_b1=off_b1, off_b2=off_b2, off_b3=off_b3, rows=rows)


def pack_params(params, state_dim, action_dim, hidden_units=(64, 64)):
    """Pack (w1,b1,w2,b2,w3,b3) into one (rows, H) f32 buffer (built once).

    w3 is zero-padded to H output columns and b3's padded columns are set to
    -1e30 so the extra logits underflow to 0 in the softmax and never win."""
    w1, b1, w2, b2, w3, b3 = params
    S, A = state_dim, action_dim
    H1, H2 = hidden_units
    L = _param_layout(S, H1, H2, A)
    W = L["W"]
    buf = jnp.zeros((L["rows"], W), jnp.float32)
    buf = buf.at[L["off_w1"]:L["off_w1"] + S, :H1].set(w1)
    buf = buf.at[L["off_w2"]:L["off_w2"] + H1, :H2].set(w2)
    buf = buf.at[L["off_w3"]:L["off_w3"] + H2, :A].set(w3)
    buf = buf.at[L["off_b1"], :H1].set(b1.reshape(-1))
    buf = buf.at[L["off_b2"], :H2].set(b2.reshape(-1))
    b3_row = jnp.full((W,), _NEG_BIG, jnp.float32).at[:A].set(b3.reshape(-1))
    buf = buf.at[L["off_b3"], :].set(b3_row)
    return buf


def _policy_argmax_kernel(x_ref, p_ref, idx_ref, *, S, H1, H2, A, layout):
    """Fused MLP forward + flattened argmax of the row-softmax (probs never
    materialized: row-max prob == 1/denom, so winner row = argmin(denom))."""
    x = x_ref[...]                                                   # (B, S)
    w1 = p_ref[layout["off_w1"]:layout["off_w1"] + S, :]             # (S, H1)
    w2 = p_ref[layout["off_w2"]:layout["off_w2"] + H1, :]            # (H1, H2)
    w3 = p_ref[layout["off_w3"]:layout["off_w3"] + H2, :]            # (H2, Hp) cols>=A are 0
    b1 = p_ref[layout["off_b1"]:layout["off_b1"] + 1, :]             # (1, H1)
    b2 = p_ref[layout["off_b2"]:layout["off_b2"] + 1, :]             # (1, H2)
    b3 = p_ref[layout["off_b3"]:layout["off_b3"] + 1, :]             # (1, Hp) cols>=A are -1e30

    h1 = jnp.tanh(jnp.dot(x, w1, preferred_element_type=jnp.float32) + b1)
    h2 = jnp.tanh(jnp.dot(h1, w2, preferred_element_type=jnp.float32) + b2)
    logits = jnp.dot(h2, w3, preferred_element_type=jnp.float32) + b3  # (B, Hp)

    B, Hp = logits.shape
    m = jnp.max(logits, axis=1, keepdims=True)                       # (B, 1) row max
    denom = jnp.sum(jnp.exp(logits - m), axis=1, keepdims=True)      # (B, 1) softmax denom
    dmin = jnp.min(denom, axis=0, keepdims=True)                     # (1, 1)

    # Winner mask: row whose max prob (=1/denom) is globally largest, AND the
    # column(s) achieving that row's max logit.  First flattened index wins.
    row_ids = jax.lax.broadcasted_iota(jnp.int32, (B, Hp), 0)
    col_ids = jax.lax.broadcasted_iota(jnp.int32, (B, Hp), 1)
    winners = jnp.logical_and(logits >= m, denom <= dmin)            # (B, Hp)
    flat = jnp.where(winners, row_ids * A + col_ids, _I32_MAX)
    idx_ref[...] = jnp.min(jnp.min(flat, axis=1, keepdims=True),
                           axis=0, keepdims=True)                    # (1, 1)


def make_discrete_policy_forward(state_dim, action_dim, hidden_units=(64, 64)):
    """Returns a jitted forward(states, packed_params) -> (1,) int32 flattened
    argmax of softmax(net(states), dim=1)  (matches torch.tensor([argmax]))."""
    S, A = state_dim, action_dim
    H1, H2 = hidden_units
    layout = _param_layout(S, H1, H2, A)
    kernel = functools.partial(_policy_argmax_kernel,
                               S=S, H1=H1, H2=H2, A=A, layout=layout)

    def forward(states, packed_params):
        B = states.shape[0]
        full = lambda shape: pl.BlockSpec(shape, lambda: tuple(0 for _ in shape))
        idx = pl.pallas_call(
            kernel,
            out_shape=jax.ShapeDtypeStruct((1, 1), jnp.int32),
            grid=(),
            in_specs=[full((B, S)), full((layout["rows"], layout["W"]))],
            out_specs=full((1, 1)),
        )(states, packed_params)
        return idx.reshape(1)

    return jax.jit(forward)


# TODO(synk): `sample` / `evaluate_log_pi` (Categorical sampling, gather of
# log-probs) are not part of forward() and are left to the JAX wrapper level.


def init_params(key, state_dim, action_dim, hidden_units=(64, 64)):
    """Deterministic synthetic init (weights stored (in_dim, out_dim): x @ W + b)."""
    dims = [state_dim, *hidden_units, action_dim]
    params = []
    for i in range(len(dims) - 1):
        key, kw, kb = jax.random.split(key, 3)
        bound = 1.0 / jnp.sqrt(jnp.float32(dims[i]))
        w = jax.random.uniform(kw, (dims[i], dims[i + 1]), jnp.float32,
                               -bound, bound)
        b = jax.random.uniform(kb, (1, dims[i + 1]), jnp.float32, -bound, bound)
        params.extend([w, b])
    return tuple(params)


if __name__ == "__main__":
    key = jax.random.PRNGKey(0)
    k_params, k_states = jax.random.split(key)

    batch = 2
    state_dim = 8        # state_shape[0]
    action_dim = 6       # action_shape[0]
    hidden = (64, 64)

    params = init_params(k_params, state_dim, action_dim, hidden)
    packed = pack_params(params, state_dim, action_dim, hidden)
    states = jax.random.normal(k_states, (batch, state_dim), jnp.float32)

    forward = make_discrete_policy_forward(state_dim, action_dim, hidden)
    action = forward(states, packed)
    jax.block_until_ready(action)

    # Pure-JAX reference of the forward semantics (flattened argmax of softmax).
    w1, b1, w2, b2, w3, b3 = params
    h1 = jnp.tanh(states @ w1 + b1)
    h2 = jnp.tanh(h1 @ w2 + b2)
    ref = jnp.argmax(jax.nn.softmax(h2 @ w3 + b3, axis=1))

    assert action.shape == (1,)
    assert action.dtype == jnp.int32
    assert 0 <= int(action[0]) < batch * action_dim
    assert int(action[0]) == int(ref), (int(action[0]), int(ref))
    print("KERNEL_OK")
</pallas_src>

<mosaic_0001>
module attributes {stable_mosaic.version = 11 : i64} {
  func.func @_policy_argmax_kernel(%arg0: memref<2x8xf32, #tpu.memory_space<vmem>>, %arg1: memref<160x64xf32, #tpu.memory_space<vmem>>, %arg2: memref<1x1xi32, #tpu.memory_space<vmem>>) attributes {dimension_semantics = [], scalar_prefetch = 0 : i64, scratch_operands = 0 : i64, tpu.core_type = #tpu.core_type<tc>} {
    %c0 = arith.constant 0 : index
    %c0_0 = arith.constant 0 : index
    %0 = vector.load %arg0[%c0, %c0_0] : memref<2x8xf32, #tpu.memory_space<vmem>>, vector<2x8xf32>
    %c0_1 = arith.constant 0 : index
    %c0_2 = arith.constant 0 : index
    %1 = vector.load %arg1[%c0_1, %c0_2] : memref<160x64xf32, #tpu.memory_space<vmem>>, vector<8x64xf32>
    %c8 = arith.constant 8 : index
    %c0_3 = arith.constant 0 : index
    %2 = vector.load %arg1[%c8, %c0_3] : memref<160x64xf32, #tpu.memory_space<vmem>>, vector<64x64xf32>
    %c72 = arith.constant 72 : index
    %c0_4 = arith.constant 0 : index
    %3 = vector.load %arg1[%c72, %c0_4] : memref<160x64xf32, #tpu.memory_space<vmem>>, vector<64x64xf32>
    %c136 = arith.constant 136 : index
    %c0_5 = arith.constant 0 : index
    %4 = vector.load %arg1[%c136, %c0_5] : memref<160x64xf32, #tpu.memory_space<vmem>>, vector<1x64xf32>
    %c144 = arith.constant 144 : index
    %c0_6 = arith.constant 0 : index
    %5 = vector.load %arg1[%c144, %c0_6] : memref<160x64xf32, #tpu.memory_space<vmem>>, vector<1x64xf32>
    %c152 = arith.constant 152 : index
    %c0_7 = arith.constant 0 : index
    %6 = vector.load %arg1[%c152, %c0_7] : memref<160x64xf32, #tpu.memory_space<vmem>>, vector<1x64xf32>
    %cst = arith.constant dense<0.000000e+00> : vector<2x64xf32>
    %7 = tpu.matmul %0, %1, %cst {dimension_numbers = #tpu.dot_dimension_numbers<[1], [0], [0], [1], [0, 0, 1, 1], [], []>} : vector<2x8xf32>, vector<8x64xf32>, vector<2x64xf32> -> vector<2x64xf32>
    %8 = vector.broadcast %4 : vector<1x64xf32> to vector<2x64xf32>
    %9 = arith.addf %7, %8 : vector<2x64xf32>
    %10 = math.tanh %9 : vector<2x64xf32>
    %cst_8 = arith.constant dense<0.000000e+00> : vector<2x64xf32>
    %11 = tpu.matmul %10, %2, %cst_8 {dimension_numbers = #tpu.dot_dimension_numbers<[1], [0], [0], [1], [0, 0, 1, 1], [], []>} : vector<2x64xf32>, vector<64x64xf32>, vector<2x64xf32> -> vector<2x64xf32>
    %12 = vector.broadcast %5 : vector<1x64xf32> to vector<2x64xf32>
    %13 = arith.addf %11, %12 : vector<2x64xf32>
    %14 = math.tanh %13 : vector<2x64xf32>
    %cst_9 = arith.constant dense<0.000000e+00> : vector<2x64xf32>
    %15 = tpu.matmul %14, %3, %cst_9 {dimension_numbers = #tpu.dot_dimension_numbers<[1], [0], [0], [1], [0, 0, 1, 1], [], []>} : vector<2x64xf32>, vector<64x64xf32>, vector<2x64xf32> -> vector<2x64xf32>
    %16 = vector.broadcast %6 : vector<1x64xf32> to vector<2x64xf32>
    %17 = arith.addf %15, %16 : vector<2x64xf32>
    %cst_10 = arith.constant dense<0xFF800000> : vector<2xf32>
    %18 = vector.multi_reduction <maximumf>, %17, %cst_10 [1] : vector<2x64xf32> to vector<2xf32>
    %19 = vector.shape_cast %18 : vector<2xf32> to vector<2x1xf32>
    %20 = vector.broadcast %19 : vector<2x1xf32> to vector<2x64xf32>
    %21 = arith.subf %17, %20 : vector<2x64xf32>
    %22 = math.exp %21 : vector<2x64xf32>
    %cst_11 = arith.constant dense<0.000000e+00> : vector<2xf32>
    %23 = vector.multi_reduction <add>, %22, %cst_11 [1] : vector<2x64xf32> to vector<2xf32>
    %24 = vector.shape_cast %23 : vector<2xf32> to vector<2x1xf32>
    %cst_12 = arith.constant dense<0x7F800000> : vector<1xf32>
    %25 = vector.multi_reduction <minimumf>, %24, %cst_12 [0] : vector<2x1xf32> to vector<1xf32>
    %26 = vector.shape_cast %25 : vector<1xf32> to vector<1x1xf32>
    %27 = tpu.iota {dimensions = array<i32: 0>} : vector<2x64xi32>
    %28 = tpu.iota {dimensions = array<i32: 1>} : vector<2x64xi32>
    %29 = vector.broadcast %19 : vector<2x1xf32> to vector<2x64xf32>
    %30 = arith.cmpf oge, %17, %29 : vector<2x64xf32>
    %31 = vector.broadcast %26 : vector<1x1xf32> to vector<2x1xf32>
    %32 = arith.cmpf ole, %24, %31 : vector<2x1xf32>
    %33 = vector.broadcast %32 : vector<2x1xi1> to vector<2x64xi1>
    %34 = arith.andi %30, %33 : vector<2x64xi1>
    %c6_i32 = arith.constant 6 : i32
    %35 = vector.broadcast %c6_i32 : i32 to vector<2x64xi32>
    %36 = arith.muli %27, %35 : vector<2x64xi32>
    %37 = arith.addi %36, %28 : vector<2x64xi32>
    %c2147483647_i32 = arith.constant 2147483647 : i32
    %38 = vector.broadcast %c2147483647_i32 : i32 to vector<2x64xi32>
    %39 = arith.select %34, %37, %38 : vector<2x64xi1>, vector<2x64xi32>
    %cst_13 = arith.constant dense<2147483647> : vector<2xi32>
    %40 = vector.multi_reduction <minsi>, %39, %cst_13 [1] : vector<2x64xi32> to vector<2xi32>
    %41 = vector.shape_cast %40 : vector<2xi32> to vector<2x1xi32>
    %cst_14 = arith.constant dense<2147483647> : vector<1xi32>
    %42 = vector.multi_reduction <minsi>, %41, %cst_14 [0] : vector<2x1xi32> to vector<1xi32>
    %43 = vector.shape_cast %42 : vector<1xi32> to vector<1x1xi32>
    %c0_15 = arith.constant 0 : index
    %c0_16 = arith.constant 0 : index
    %44 = vector.load %arg2[%c0_15, %c0_16] : memref<1x1xi32, #tpu.memory_space<vmem>>, vector<1x1xi32>
    tpu.vector_store %arg2[%c0_15, %c0_16], %43 {strides = array<i32>} : memref<1x1xi32, #tpu.memory_space<vmem>>, vector<1x1xi32>,
    return
  }
}

</mosaic_0001>

<llo_original>
// kernel: forward.1
$region0: #{forward.1}
  #allocation0 [shape = 'u32[]', space=smem, size = 0x4, offset = 0x4, fixed_abs, tag = 'smem constant byte address 0x4 - core index']
  #allocation1 [shape = 'u32[144,128]{1,0:T(1,128)}', space=vmem, size = 0x12000, scoped, tag = 'internal scratch']
  %s0 = inlined_call_operand.vmem [shape: f32[2,8], index: 0, kind: input, shape index: {}]
  %s1 = inlined_call_operand.vmem [shape: f32[160,64], index: 1, kind: input, shape index: {}]
  %s2 = inlined_call_operand.hbm [shape: s32[1,1], index: 2, kind: output, shape index: {}]
  %s3 = sld [smem:[#allocation0]]
  $region18: #{forward.1} parent=0
    _
  %s5 = ssub.s32 1, %s3
  %s6 = scalar_select 0, %s5, %s3
  $region1: #{forward.1} parent=0
    #allocation2 [shape = 'u8[512]{0}', space=vmem, size = 0x400, scoped, tag = 'output window, operand 0, single buffered']
    #allocation3 [shape = 's32[1]{0}', space=sflag, size = 0x4, scoped, tag = 'scoped memory for forward.1']
    %7 = vsyncpa [#allocation3], 0
    // Predicated region
    $region2: #{forward.1} parent=1 // pred_check
      _
    $region3: #{forward.1} parent=1 // pred_check_branch
      %9 = sbr.rel (0) target = $region5
    $region4: #{forward.1} parent=1 // pred_region
      _
    $region5: #{forward.1} parent=1 // pred_fallthru
      _
    // Predicated region
    $region6: #{forward.1} parent=1 // pred_check
      _
    $region7: #{forward.1} parent=1 // pred_check_branch
      %11 = sbr.rel (0) target = $region9
    $region8: #{forward.1} parent=1 // pred_region
      _
    $region9: #{forward.1} parent=1 // pred_fallthru
      _
    %v12 = vld [vmem:[%s0] sm:$0x3]
    %v13 = vld [vmem:[%s1] sm:$0xff]
    %v14 = vld [vmem:[%s1 + $0x8] sm:$0xff]
    %v15 = vld [vmem:[%s1 + $0x10] sm:$0xff]
    %v16 = vld [vmem:[%s1 + $0x18] sm:$0xff]
    %v17 = vld [vmem:[%s1 + $0x20] sm:$0xff]
    %v18 = vld [vmem:[%s1 + $0x28] sm:$0xff]
    %v19 = vld [vmem:[%s1 + $0x30] sm:$0xff]
    %v20 = vld [vmem:[%s1 + $0x38] sm:$0xff]
    %v21 = vld [vmem:[%s1 + $0x40] sm:$0xff]
    %v22 = vld [vmem:[%s1 + $0x48] sm:$0xff]
    %v23 = vld [vmem:[%s1 + $0x50] sm:$0xff]
    %v24 = vld [vmem:[%s1 + $0x58] sm:$0xff]
    %v25 = vld [vmem:[%s1 + $0x60] sm:$0xff]
    %v26 = vld [vmem:[%s1 + $0x68] sm:$0xff]
    %v27 = vld [vmem:[%s1 + $0x70] sm:$0xff]
    %v28 = vld [vmem:[%s1 + $0x78] sm:$0xff]
    %v29 = vld [vmem:[%s1 + $0x80] sm:$0xff]
    %v30 = vld [vmem:[%s1 + $0x88] sm:$0x1]
    %v31 = vld [vmem:[%s1 + $0x90] sm:$0x1]
    %v32 = vld [vmem:[%s1 + $0x98] sm:$0x1]
    %v33 = vlaneseq
    %v34 = vshrl.u32 %v33, 7
    %v35 = vsub.s32 0, %v34
    %v36 = vrot.slane %v30, %v35
    %vm37 = vcmask 64512
    %v39 = vsel %vm37, %v12, 0
    %41 = vmatprep.subr.mxu0 0.0
    %42 = vmatpush1.msra.mxu0 0.0
    %43 = vmatprep.subr.mxu0 0.0
    %44 = vmatpush1.msra.mxu0 0.0
    %45 = vmatprep.subr.mxu0 0.0
    %46 = vmatpush1.msra.mxu0 0.0
    %47 = vmatprep.subr.mxu0 0.0
    %48 = vmatpush1.msra.mxu0 0.0
    %49 = vmatprep.subr.mxu0 0.0
    %50 = vmatpush1.msra.mxu0 0.0
    %51 = vmatprep.subr.mxu0 0.0
    %52 = vmatpush1.msra.mxu0 0.0
    %53 = vmatprep.subr.mxu0 0.0
    %54 = vmatpush1.msra.mxu0 0.0
    %55 = vmatprep.subr.mxu0 0.0
    %56 = vmatpush1.msra.mxu0 0.0
    %57 = vmatprep.subr.mxu0 0.0
    %58 = vmatpush1.msra.mxu0 0.0
    %59 = vmatprep.subr.mxu0 0.0
    %60 = vmatpush1.msra.mxu0 0.0
    %61 = vmatprep.subr.mxu0 0.0
    %62 = vmatpush1.msra.mxu0 0.0
    %63 = vmatprep.subr.mxu0 0.0
    %64 = vmatpush1.msra.mxu0 0.0
    %65 = vmatprep.subr.mxu0 0.0
    %66 = vmatpush1.msra.mxu0 0.0
    %67 = vmatprep.subr.mxu0 0.0
    %68 = vmatpush1.msra.mxu0 0.0
    %69 = vmatprep.subr.mxu0 0.0
    %70 = vmatpush1.msra.mxu0 0.0
    %71 = vmatprep.subr.mxu0 0.0
    %72 = vmatpush1.msra.mxu0 %v13
    %73 = vmatprep.subr.mxu0 0.0
    %74 = vmatpush2.msra.mxu0 0.0
    %75 = vmatprep.subr.mxu0 0.0
    %76 = vmatpush2.msra.mxu0 0.0
    %77 = vmatprep.subr.mxu0 0.0
    %78 = vmatpush2.msra.mxu0 0.0
    %79 = vmatprep.subr.mxu0 0.0
    %80 = vmatpush2.msra.mxu0 0.0
    %81 = vmatprep.subr.mxu0 0.0
    %82 = vmatpush2.msra.mxu0 0.0
    %83 = vmatprep.subr.mxu0 0.0
    %84 = vmatpush2.msra.mxu0 0.0
    %85 = vmatprep.subr.mxu0 0.0
    %86 = vmatpush2.msra.mxu0 0.0
    %87 = vmatprep.subr.mxu0 0.0
    %88 = vmatpush2.msra.mxu0 0.0
    %89 = vmatprep.subr.mxu0 0.0
    %90 = vmatpush2.msra.mxu0 0.0
    %91 = vmatprep.subr.mxu0 0.0
    %92 = vmatpush2.msra.mxu0 0.0
    %93 = vmatprep.subr.mxu0 0.0
    %94 = vmatpush2.msra.mxu0 0.0
    %95 = vmatprep.subr.mxu0 0.0
    %96 = vmatpush2.msra.mxu0 0.0
    %97 = vmatprep.subr.mxu0 0.0
    %98 = vmatpush2.msra.mxu0 0.0
    %99 = vmatprep.subr.mxu0 0.0
    %100 = vmatpush2.msra.mxu0 0.0
    %101 = vmatprep.subr.mxu0 0.0
    %102 = vmatpush2.msra.mxu0 0.0
    %103 = vmatprep.subr.mxu0 0.0
    %104 = vmatpush2.msra.mxu0 0.0
    %105 = vmatprep.mubr.f32.mxu0 0.0
    %106 = vmatmul.mubr.f32.gmra.mxu0 %v39
    %v107 = vpop.f32.mrf.mxu0
    %v108 = vadd.f32 %v36, %v107
    %v109 = vpop.f32.mrf.mxu0
    %110 = vdwg.mxu0
    %v111 = vtanh.pop %v108
    %v112 = vlaneseq
    %v113 = vshrl.u32 %v112, 7
    %v114 = vsub.s32 0, %v113
    %v115 = vrot.slane %v31, %v114
    %vm116 = vcmask 523264
    %v118 = vsel %vm116, %v111, 0
    %120 = vmatprep.subr.mxu0 0.0
    %121 = vmatpush1.msra.mxu0 0.0
    %122 = vmatprep.subr.mxu0 0.0
    %123 = vmatpush1.msra.mxu0 0.0
    %124 = vmatprep.subr.mxu0 0.0
    %125 = vmatpush1.msra.mxu0 0.0
    %126 = vmatprep.subr.mxu0 0.0
    %127 = vmatpush1.msra.mxu0 0.0
    %128 = vmatprep.subr.mxu0 0.0
    %129 = vmatpush1.msra.mxu0 0.0
    %130 = vmatprep.subr.mxu0 0.0
    %131 = vmatpush1.msra.mxu0 0.0
    %132 = vmatprep.subr.mxu0 0.0
    %133 = vmatpush1.msra.mxu0 0.0
    %134 = vmatprep.subr.mxu0 0.0
    %135 = vmatpush1.msra.mxu0 0.0
    %136 = vmatprep.subr.mxu0 0.0
    %137 = vmatpush1.msra.mxu0 %v21
    %138 = vmatprep.subr.mxu0 0.0
    %139 = vmatpush1.msra.mxu0 %v20
    %140 = vmatprep.subr.mxu0 0.0
    %141 = vmatpush1.msra.mxu0 %v19
    %142 = vmatprep.subr.mxu0 0.0
    %143 = vmatpush1.msra.mxu0 %v18
    %144 = vmatprep.subr.mxu0 0.0
    %145 = vmatpush1.msra.mxu0 %v17
    %146 = vmatprep.subr.mxu0 0.0
    %147 = vmatpush1.msra.mxu0 %v16
    %148 = vmatprep.subr.mxu0 0.0
    %149 = vmatpush1.msra.mxu0 %v15
    %150 = vmatprep.subr.mxu0 0.0
    %151 = vmatpush1.msra.mxu0 %v14
    %152 = vmatprep.subr.mxu0 0.0
    %153 = vmatpush2.msra.mxu0 0.0
    %154 = vmatprep.subr.mxu0 0.0
    %155 = vmatpush2.msra.mxu0 0.0
    %156 = vmatprep.subr.mxu0 0.0
    %157 = vmatpush2.msra.mxu0 0.0
    %158 = vmatprep.subr.mxu0 0.0
    %159 = vmatpush2.msra.mxu0 0.0
    %160 = vmatprep.subr.mxu0 0.0
    %161 = vmatpush2.msra.mxu0 0.0
    %162 = vmatprep.subr.mxu0 0.0
    %163 = vmatpush2.msra.mxu0 0.0
    %164 = vmatprep.subr.mxu0 0.0
    %165 = vmatpush2.msra.mxu0 0.0
    %166 = vmatprep.subr.mxu0 0.0
    %167 = vmatpush2.msra.mxu0 0.0
    %168 = vmatprep.subr.mxu0 0.0
    %169 = vmatpush2.msra.mxu0 0.0
    %170 = vmatprep.subr.mxu0 0.0
    %171 = vmatpush2.msra.mxu0 0.0
    %172 = vmatprep.subr.mxu0 0.0
    %173 = vmatpush2.msra.mxu0 0.0
    %174 = vmatprep.subr.mxu0 0.0
    %175 = vmatpush2.msra.mxu0 0.0
    %176 = vmatprep.subr.mxu0 0.0
    %177 = vmatpush2.msra.mxu0 0.0
    %178 = vmatprep.subr.mxu0 0.0
    %179 = vmatpush2.msra.mxu0 0.0
    %180 = vmatprep.subr.mxu0 0.0
    %181 = vmatpush2.msra.mxu0 0.0
    %182 = vmatprep.subr.mxu0 0.0
    %183 = vmatpush2.msra.mxu0 0.0
    %184 = vmatprep.mubr.f32.mxu0 0.0
    %185 = vmatmul.mubr.f32.gmra.mxu0 %v118
    %v186 = vpop.f32.mrf.mxu0
    %v187 = vadd.f32 %v115, %v186
    %v188 = vpop.f32.mrf.mxu0
    %189 = vdwg.mxu0
    %v190 = vtanh.pop %v187
    %v191 = vlaneseq
    %v192 = vshrl.u32 %v191, 7
    %v193 = vsub.s32 0, %v192
    %v194 = vrot.slane %v32, %v193
    %v196 = vsel %vm116, %v190, 0
    %198 = vmatprep.subr.mxu0 0.0
    %199 = vmatpush1.msra.mxu0 0.0
    %200 = vmatprep.subr.mxu0 0.0
    %201 = vmatpush1.msra.mxu0 0.0
    %202 = vmatprep.subr.mxu0 0.0
    %203 = vmatpush1.msra.mxu0 0.0
    %204 = vmatprep.subr.mxu0 0.0
    %205 = vmatpush1.msra.mxu0 0.0
    %206 = vmatprep.subr.mxu0 0.0
    %207 = vmatpush1.msra.mxu0 0.0
    %208 = vmatprep.subr.mxu0 0.0
    %209 = vmatpush1.msra.mxu0 0.0
    %210 = vmatprep.subr.mxu0 0.0
    %211 = vmatpush1.msra.mxu0 0.0
    %212 = vmatprep.subr.mxu0 0.0
    %213 = vmatpush1.msra.mxu0 0.0
    %214 = vmatprep.subr.mxu0 0.0
    %215 = vmatpush1.msra.mxu0 %v29
    %216 = vmatprep.subr.mxu0 0.0
    %217 = vmatpush1.msra.mxu0 %v28
    %218 = vmatprep.subr.mxu0 0.0
    %219 = vmatpush1.msra.mxu0 %v27
    %220 = vmatprep.subr.mxu0 0.0
    %221 = vmatpush1.msra.mxu0 %v26
    %222 = vmatprep.subr.mxu0 0.0
    %223 = vmatpush1.msra.mxu0 %v25
    %224 = vmatprep.subr.mxu0 0.0
    %225 = vmatpush1.msra.mxu0 %v24
    %226 = vmatprep.subr.mxu0 0.0
    %227 = vmatpush1.msra.mxu0 %v23
    %228 = vmatprep.subr.mxu0 0.0
    %229 = vmatpush1.msra.mxu0 %v22
    %230 = vmatprep.subr.mxu0 0.0
    %231 = vmatpush2.msra.mxu0 0.0
    %232 = vmatprep.subr.mxu0 0.0
    %233 = vmatpush2.msra.mxu0 0.0
    %234 = vmatprep.subr.mxu0 0.0
    %235 = vmatpush2.msra.mxu0 0.0
    %236 = vmatprep.subr.mxu0 0.0
    %237 = vmatpush2.msra.mxu0 0.0
    %238 = vmatprep.subr.mxu0 0.0
    %239 = vmatpush2.msra.mxu0 0.0
    %240 = vmatprep.subr.mxu0 0.0
    %241 = vmatpush2.msra.mxu0 0.0
    %242 = vmatprep.subr.mxu0 0.0
    %243 = vmatpush2.msra.mxu0 0.0
    %244 = vmatprep.subr.mxu0 0.0
    %245 = vmatpush2.msra.mxu0 0.0
    %246 = vmatprep.subr.mxu0 0.0
    %247 = vmatpush2.msra.mxu0 0.0
    %248 = vmatprep.subr.mxu0 0.0
    %249 = vmatpush2.msra.mxu0 0.0
    %250 = vmatprep.subr.mxu0 0.0
    %251 = vmatpush2.msra.mxu0 0.0
    %252 = vmatprep.subr.mxu0 0.0
    %253 = vmatpush2.msra.mxu0 0.0
    %254 = vmatprep.subr.mxu0 0.0
    %255 = vmatpush2.msra.mxu0 0.0
    %256 = vmatprep.subr.mxu0 0.0
    %257 = vmatpush2.msra.mxu0 0.0
    %258 = vmatprep.subr.mxu0 0.0
    %259 = vmatpush2.msra.mxu0 0.0
    %260 = vmatprep.subr.mxu0 0.0
    %261 = vmatpush2.msra.mxu0 0.0
    %262 = vmatprep.mubr.f32.mxu0 0.0
    %263 = vmatmul.mubr.f32.gmra.mxu0 %v196
    %v264 = vpop.f32.mrf.mxu0
    %v265 = vadd.f32 %v194, %v264
    %v266 = vpop.f32.mrf.mxu0
    %267 = vdwg.mxu0
    %vm268 = vcmask 517120
    %v269 = vsel %vm268, %v265, -inf
    %270 = vmax.xlane.f32.xlu0 %v269
    %v271 = vpop.xlane.xlu0 %270
    %v272 = vsub.f32 %v265, %v271
    %v273 = vmul.f32 %v272, 1.442695
    %v274 = vpow.pop %v273
    %v275 = vsel %vm268, %v274, 0.0
    %276 = vadd.xlane.f32.xlu0 %v275
    %v277 = vpop.xlane.xlu0 %276
    %vm278 = vcmask 1041408
    %v279 = vsel %vm278, %v277, inf
    %v280 = vrot.slane %v279, 4
    %v281 = vmin.f32 %v279, %v280
    %v282 = vrot.slane %v281, 2
    %v283 = vmin.f32 %v281, %v282
    %v284 = vrot.slane %v283, 1
    %v285 = vmin.f32 %v283, %v284
    %v286 = vlaneseq
    %v287 = vshrl.u32 %v286, 7
    %v288 = vlaneseq
    %v289 = vand.u32 %v288, 127
    %vm290 = vcmp.ge.f32.partialorder %v265, %v271
    %vm291 = vcmp.le.f32.partialorder %v277, %v285
    %v292 = vsel %vm291, 1, 0
    %vm293 = vcmp.eq.s32.totalorder %v292, 1
    %vm294 = vmand %vm290, %vm293
    %v295 = vmul.u32 %v287, 6
    %v296 = vadd.s32 %v295, %v289
    %v297 = vsel %vm294, %v296, 2147483647
    %v298 = vsel %vm268, %v297, 2147483647
    %v299 = vand.u32 %v298, 65535
    %v300 = vshra.s32 %v298, 16
    %v301 = vcvt.s32.f32 %v299
    %v302 = vcvt.s32.f32 %v300
    %303 = vmin.xlane.f32.xlu0 %v302
    %v304 = vpop.xlane.xlu0 %303
    %vm305 = vcmp.eq.f32.partialorder %v302, %v304
    %v306 = vsel %vm305, %v301, inf
    %307 = vmin.xlane.f32.xlu0 %v306
    %v308 = vpop.xlane.xlu0 %307
    %v309 = vcvt.f32.s32 %v308
    %v310 = vcvt.f32.s32 %v304
    %v311 = vshll.u32 %v310, 16
    %v312 = vadd.s32 %v311, %v309
    %v313 = vsel %vm278, %v312, 2147483647
    %v314 = vrot.slane %v313, 4
    %vm315 = vcmp.lt.s32.totalorder %v313, %v314
    %v316 = vsel %vm315, %v313, %v314
    %v317 = vrot.slane %v316, 2
    %vm318 = vcmp.lt.s32.totalorder %v316, %v317
    %v319 = vsel %vm318, %v316, %v317
    %v320 = vrot.slane %v319, 1
    %vm321 = vcmp.lt.s32.totalorder %v319, %v320
    %v322 = vsel %vm321, %v319, %v320
    %vm323 = vcmask 0
    %324 = vst.msk [vmem:[#allocation2] sm:$0x1] %vm323, %v322
    // Predicated region
    $region10: #{forward.1} parent=1 // pred_check
      _
    $region11: #{forward.1} parent=1 // pred_check_branch
      %326 = sbr.rel (0) target = $region13
    $region12: #{forward.1} parent=1 // pred_region
      %s328 = ssub.s32 16, 16
      %329 = vsyncadd [#allocation3], %s328
      %s331 = sshll.u32 [#allocation2], 4
      %s332 = int_to_ptr.vmem [resolvable:$true] %s331
      %334 = dma.vmem_to_hbm [thread:$0]  %s332, 16, %s2, [#allocation3]
    $region13: #{forward.1} parent=1 // pred_fallthru
      _
    // Predicated region
    $region14: #{forward.1} parent=1 // pred_check
      _
    $region15: #{forward.1} parent=1 // pred_check_branch
      %336 = sbr.rel (0) target = $region17
    $region16: #{forward.1} parent=1 // pred_region
      %337 = dma.done [#allocation3], 16
    $region17: #{forward.1} parent=1 // pred_fallthru
      _
    %338 = vsyncpa [#allocation3], 1

</llo_original>
